<compile_context>
chip_gen: v7x
topology: tpu7x:2x2x1
jax: 0.10.0
libtpu: 0.0.40
codegen_flags: <defaults>
</compile_context>

<pallas_src>
import functools
import math

import jax
import jax.numpy as jnp
from jax.experimental import pallas as pl
from jax.experimental.pallas import tpu as pltpu

_VMEM_LIMIT = 40 * 1024 * 1024   # conservative for v7x; can be raised on v5e/v6e


# --------------------------------------------------------------------------
# shared helpers (pure jnp, usable inside kernels and in XLA)
# --------------------------------------------------------------------------
def _rmsnorm(x, gain, eps=1e-5):
    x32 = x.astype(jnp.float32)
    rms = jnp.sqrt(jnp.mean(x32 * x32, axis=-1, keepdims=True) + eps)
    return (x32 / rms) * gain


def _mm_nt(a, b):
    """a @ b.T (PyTorch Linear convention), f32 accumulation."""
    return jax.lax.dot_general(a, b, (((1,), (1,)), ((), ())),
                               preferred_element_type=jnp.float32)


def _mm_nn(a, b):
    """a @ b, f32 accumulation."""
    return jax.lax.dot_general(a, b, (((1,), (0,)), ((), ())),
                               preferred_element_type=jnp.float32)


# --------------------------------------------------------------------------
# attention kernel 1: RMSNorm1 + fused QKV projection + qk-norm, head-major out
# --------------------------------------------------------------------------
def qkv_project_kernel(x_ref, g1_ref, gqk_ref, wqkv_ref, q_ref, k_ref, v_ref,
                       *, num_heads):
    D = x_ref.shape[2]
    H = num_heads
    dk = D // H
    scale = 1.0 / math.sqrt(dk)

    xn = _rmsnorm(x_ref[0], g1_ref[...])                       # (ts, D) f32
    qkv = _mm_nt(xn.astype(jnp.bfloat16), wqkv_ref[...])       # (ts, 3D) f32
    q = _rmsnorm(qkv[:, :D], gqk_ref[...]) * scale             # qk-norm + folded scale
    k = _rmsnorm(qkv[:, D:2 * D], gqk_ref[...])
    v = qkv[:, 2 * D:]
    for h in range(H):                                         # once per token tile
        hs = slice(h * dk, (h + 1) * dk)
        q_ref[0, h] = q[:, hs].astype(jnp.bfloat16)
        k_ref[0, h] = k[:, hs].astype(jnp.bfloat16)
        v_ref[0, h] = v[:, hs].astype(jnp.bfloat16)


# --------------------------------------------------------------------------
# attention kernel 2: flash attention over lower-triangular tile pairs
# --------------------------------------------------------------------------
def flash_kernel(qi_tbl, ki_tbl, q_ref, k_ref, v_ref, o_ref, m_sc, l_sc, acc_sc):
    t = pl.program_id(2)
    qi = qi_tbl[t]
    ki = ki_tbl[t]

    @pl.when(ki == 0)
    def _init():
        m_sc[...] = jnp.full_like(m_sc, -jnp.inf)
        l_sc[...] = jnp.zeros_like(l_sc)
        acc_sc[...] = jnp.zeros_like(acc_sc)

    q = q_ref[0, 0]                                            # (tq, dk) bf16
    k = k_ref[0, 0]
    v = v_ref[0, 0]
    s = _mm_nt(q, k)                                           # (tq, tk) f32

    def online_update(scores):
        m_prev = m_sc[...]
        m_new = jnp.maximum(m_prev, jnp.max(scores, axis=-1, keepdims=True))
        alpha = jnp.exp(m_prev - m_new)
        p = jnp.exp(scores - m_new)
        l_sc[...] = alpha * l_sc[...] + jnp.sum(p, axis=-1, keepdims=True)
        acc_sc[...] = alpha * acc_sc[...] + jnp.dot(
            p.astype(jnp.bfloat16), v, preferred_element_type=jnp.float32)
        m_sc[...] = m_new

    @pl.when(ki < qi)                 # fully-visible tile: no mask work
    def _full():
        online_update(s)

    @pl.when(ki == qi)                # diagonal tile: mask, then finalize
    def _diag():
        rows = jax.lax.broadcasted_iota(jnp.int32, s.shape, 0)
        cols = jax.lax.broadcasted_iota(jnp.int32, s.shape, 1)
        online_update(jnp.where(cols <= rows, s, -jnp.inf))
        inv = pl.reciprocal(l_sc[...], approx=True)
        o_ref[0, 0] = (acc_sc[...] * inv).astype(o_ref.dtype)


# --------------------------------------------------------------------------
# attention kernel 3: output projection (per-head Wo blocks) + residual
# --------------------------------------------------------------------------
def out_proj_kernel(x_ref, ctx_ref, wo_ref, y_ref, *, num_heads):
    out = None
    for h in range(num_heads):
        contrib = _mm_nn(ctx_ref[0, h], wo_ref[h])             # (ts, D) f32
        out = contrib if out is None else out + contrib
    y_ref[0] = (x_ref[0].astype(jnp.float32) + out).astype(y_ref.dtype)


def attn_residual(x, g1, wq, wk, wv, wo, gqk, *, num_heads, tile=None):
    """y = x + MHSA(RMSNorm1(x))  (causal, qk-norm)."""
    B, S, D = x.shape
    H = num_heads
    assert D % H == 0
    dk = D // H
    tile = min(S, 256) if tile is None else tile
    assert S % tile == 0

    wqkv = jnp.concatenate([wq, wk, wv], axis=0).astype(jnp.bfloat16)   # (3D, D)

    qkv_cost = pl.CostEstimate(
        flops=2 * B * S * D * 3 * D, transcendentals=0,
        bytes_accessed=4 * B * S * D + 2 * 3 * D * D + 3 * 2 * B * S * D)

    q_hm, k_hm, v_hm = pl.pallas_call(
        functools.partial(qkv_project_kernel, num_heads=H),
        out_shape=tuple(jax.ShapeDtypeStruct((B, H, S, dk), jnp.bfloat16)
                        for _ in range(3)),
        grid=(B, S // tile),
        in_specs=[
            pl.BlockSpec((1, tile, D), lambda b, s: (b, s, 0)),     # x rows
            pl.BlockSpec((1, D), lambda b, s: (0, 0)),              # norm1 gain
            pl.BlockSpec((1, D), lambda b, s: (0, 0)),              # qk-norm gain
            pl.BlockSpec((3 * D, D), lambda b, s: (0, 0)),          # W_Q|W_K|W_V
        ],
        out_specs=tuple(pl.BlockSpec((1, H, tile, dk), lambda b, s: (b, 0, s, 0))
                        for _ in range(3)),
        compiler_params=pltpu.CompilerParams(
            dimension_semantics=("parallel", "parallel"),
            vmem_limit_bytes=_VMEM_LIMIT),
        cost_estimate=qkv_cost,
    )(x, g1, gqk, wqkv)

    # lower-triangular (qi, ki) pair table: fully-masked kv tiles never enter
    # the grid (halves K/V streaming and step count vs. the dense grid).
    nq = S // tile
    pairs = [(qi, ki) for qi in range(nq) for ki in range(qi + 1)]
    qi_tbl = jnp.asarray([p[0] for p in pairs], dtype=jnp.int32)
    ki_tbl = jnp.asarray([p[1] for p in pairs], dtype=jnp.int32)
    npairs = len(pairs)

    flash_cost = pl.CostEstimate(
        flops=4 * B * H * npairs * tile * tile * dk,
        transcendentals=B * H * npairs * tile * tile,
        bytes_accessed=2 * B * H * npairs * 3 * tile * dk + 2 * B * H * S * dk)

    ctx = pl.pallas_call(
        flash_kernel,
        out_shape=jax.ShapeDtypeStruct((B, H, S, dk), jnp.bfloat16),
        grid_spec=pltpu.PrefetchScalarGridSpec(
            num_scalar_prefetch=2,
            grid=(B, H, npairs),
            in_specs=[
                pl.BlockSpec((1, 1, tile, dk),
                             lambda b, h, t, qt, kt: (b, h, qt[t], 0)),   # Q
                pl.BlockSpec((1, 1, tile, dk),
                             lambda b, h, t, qt, kt: (b, h, kt[t], 0)),   # K
                pl.BlockSpec((1, 1, tile, dk),
                             lambda b, h, t, qt, kt: (b, h, kt[t], 0)),   # V
            ],
            out_specs=pl.BlockSpec((1, 1, tile, dk),
                                   lambda b, h, t, qt, kt: (b, h, qt[t], 0)),
            scratch_shapes=[
                pltpu.VMEM((tile, 1), jnp.float32),      # running max
                pltpu.VMEM((tile, 1), jnp.float32),      # running denom
                pltpu.VMEM((tile, dk), jnp.float32),     # attn accumulator
            ]),
        compiler_params=pltpu.CompilerParams(
            dimension_semantics=("parallel", "parallel", "arbitrary"),
            vmem_limit_bytes=_VMEM_LIMIT),
        cost_estimate=flash_cost,
    )(qi_tbl, ki_tbl, q_hm, k_hm, v_hm)

    # W_O reorganized head-major: wo_hm[h] = W_O[:, h*dk:(h+1)*dk].T  -> (dk, D)
    wo_hm = jnp.transpose(wo.reshape(D, H, dk), (1, 2, 0)).astype(jnp.bfloat16)

    proj_cost = pl.CostEstimate(
        flops=2 * B * S * D * D, transcendentals=0,
        bytes_accessed=4 * B * S * D + 2 * B * S * D + 2 * D * D + 4 * B * S * D)

    y = pl.pallas_call(
        functools.partial(out_proj_kernel, num_heads=H),
        out_shape=jax.ShapeDtypeStruct((B, S, D), x.dtype),
        grid=(B, S // tile),
        in_specs=[
            pl.BlockSpec((1, tile, D), lambda b, s: (b, s, 0)),        # x (residual)
            pl.BlockSpec((1, H, tile, dk), lambda b, s: (b, 0, s, 0)),  # attn ctx
            pl.BlockSpec((H, dk, D), lambda b, s: (0, 0, 0)),           # W_O blocks
        ],
        out_specs=pl.BlockSpec((1, tile, D), lambda b, s: (b, s, 0)),
        compiler_params=pltpu.CompilerParams(
            dimension_semantics=("parallel", "parallel"),
            vmem_limit_bytes=_VMEM_LIMIT),
        cost_estimate=proj_cost,
    )(x, ctx, wo_hm)
    return y


# --------------------------------------------------------------------------
# MoE: router in XLA, sparse per-tile expert dispatch in Pallas
# --------------------------------------------------------------------------
def _router_gates(y, g2, wg, wn, noise, top_k):
    """Noisy top-k router (gates of unselected experts are exactly 0)."""
    E = wg.shape[0]
    yn = _rmsnorm(y, g2)
    ynb = yn.astype(jnp.bfloat16)
    raw = jnp.einsum("bsd,ed->bse", ynb, wg.astype(jnp.bfloat16),
                     preferred_element_type=jnp.float32)
    rawn = jnp.einsum("bsd,ed->bse", ynb, wn.astype(jnp.bfloat16),
                      preferred_element_type=jnp.float32)
    sp = jnp.where(rawn > 20.0, rawn,
                   jnp.log1p(jnp.exp(jnp.minimum(rawn, 20.0))))          # softplus
    combined = sp * noise + raw
    _, idx = jax.lax.top_k(combined, top_k)
    keep = jnp.any(idx[..., None] == jnp.arange(E), axis=-2)             # (B,S,E)
    gates = jax.nn.softmax(jnp.where(keep, combined, -jnp.inf), axis=-1)  # exact
    return gates, keep


def moe_expert_kernel(order_ref, counts_ref, y_ref, g2_ref, sg_ref, w13_ref,
                      w2_ref, z_ref, ynb_sc, acc_sc, *, num_experts, dff_p,
                      n_tiles):
    b = pl.program_id(0)
    s = pl.program_id(1)
    j = pl.program_id(2)                      # expert slot within this tile
    E = num_experts

    @pl.when(j == 0)
    def _init():
        ynb_sc[...] = _rmsnorm(y_ref[0], g2_ref[...]).astype(jnp.bfloat16)
        acc_sc[...] = jnp.zeros_like(acc_sc)

    n_active = counts_ref[b * n_tiles + s]

    @pl.when(j < n_active)                    # sparse dispatch: skip unused experts
    def _expert():
        ynb = ynb_sc[...]
        h = _mm_nt(ynb, w13_ref[0])           # (ts, 2*dff_p) f32, fused w1|w3
        h1 = h[:, :dff_p]
        h3 = h[:, dff_p:]
        g = (h1 * jax.nn.sigmoid(h1)) * h3    # SwiGLU
        oe = _mm_nt(g.astype(jnp.bfloat16), w2_ref[0])     # (ts, D) f32
        acc_sc[...] = acc_sc[...] + sg_ref[0, 0] * oe      # (ts, 1) slot gate

    @pl.when(j == E - 1)
    def _finalize():
        z_ref[0] = (y_ref[0].astype(jnp.float32) + acc_sc[...]).astype(z_ref.dtype)


def moe_residual(y, g2, wg, wn, noise, w1, w3, w2, *, num_experts, top_k, ts=None):
    """z = y + SparseMoE(RMSNorm2(y))."""
    B, S, D = y.shape
    E = num_experts
    dff = w1.shape[1]
    dff_p = ((dff + 127) // 128) * 128        # lane-aligned padded d_ff
    ts = min(S, 256) if ts is None else ts
    assert S % ts == 0
    n_tiles = S // ts

    # tiny router in XLA
    gates, keep = _router_gates(y, g2, wg, wn, noise, top_k)

    # per-tile expert schedule: hit experts first; unused slots repeat the last
    # hit expert so their weight DMA is skipped (consecutive identical index).
    tile_keep = keep.reshape(B, n_tiles, ts, E).any(axis=2)              # (B,nt,E)
    counts = tile_keep.sum(axis=-1).astype(jnp.int32)                    # (B,nt)
    e_range = jnp.arange(E, dtype=jnp.int32)
    order = jnp.argsort(jnp.where(tile_keep, e_range, e_range + E),
                        axis=-1).astype(jnp.int32)
    slot = jnp.broadcast_to(e_range, order.shape)
    order = jnp.take_along_axis(order,
                                jnp.minimum(slot, counts[..., None] - 1), axis=-1)
    order_flat = order.reshape(-1)
    counts_flat = counts.reshape(-1)

    # slot-major gate columns gathered in XLA: sg[b, j, s, 0] = gate of token s
    # for the expert scheduled in slot j of its tile.
    order_tok = jnp.repeat(order, ts, axis=1)                            # (B,S,E)
    slot_gates = jnp.take_along_axis(gates, order_tok, axis=-1)          # (B,S,E)
    slot_gates = jnp.transpose(slot_gates, (0, 2, 1))[..., None]         # (B,E,S,1)

    # padded, fused expert weights
    w1p = jnp.pad(w1, ((0, 0), (0, dff_p - dff), (0, 0)))
    w3p = jnp.pad(w3, ((0, 0), (0, dff_p - dff), (0, 0)))
    w13b = jnp.concatenate([w1p, w3p], axis=1).astype(jnp.bfloat16)      # (E,2dff_p,D)
    w2b = jnp.pad(w2, ((0, 0), (0, 0), (0, dff_p - dff))).astype(jnp.bfloat16)

    moe_cost = pl.CostEstimate(
        flops=2 * B * S * E * 3 * dff_p * D,
        transcendentals=B * S * E * dff_p,
        bytes_accessed=B * n_tiles * E * 3 * dff_p * D * 2 + 3 * 4 * B * S * D)

    kernel = functools.partial(moe_expert_kernel, num_experts=E, dff_p=dff_p,
                               n_tiles=n_tiles)
    grid_spec = pltpu.PrefetchScalarGridSpec(
        num_scalar_prefetch=2,
        grid=(B, n_tiles, E),
        in_specs=[
            pl.BlockSpec((1, ts, D), lambda b, s, j, od, ct: (b, s, 0)),       # y
            pl.BlockSpec((1, D), lambda b, s, j, od, ct: (0, 0)),              # norm2 gain
            pl.BlockSpec((1, 1, ts, 1), lambda b, s, j, od, ct: (b, j, s, 0)),  # slot gates
            pl.BlockSpec((1, 2 * dff_p, D),
                         lambda b, s, j, od, ct: (od[(b * n_tiles + s) * E + j], 0, 0)),
            pl.BlockSpec((1, D, dff_p),
                         lambda b, s, j, od, ct: (od[(b * n_tiles + s) * E + j], 0, 0)),
        ],
        out_specs=pl.BlockSpec((1, ts, D), lambda b, s, j, od, ct: (b, s, 0)),
        scratch_shapes=[
            pltpu.VMEM((ts, D), jnp.bfloat16),        # RMSNorm2(y) in bf16
            pltpu.VMEM((ts, D), jnp.float32),         # MoE accumulator
        ])

    z = pl.pallas_call(
        kernel,
        out_shape=jax.ShapeDtypeStruct((B, S, D), y.dtype),
        grid_spec=grid_spec,
        compiler_params=pltpu.CompilerParams(
            dimension_semantics=("parallel", "parallel", "arbitrary"),
            vmem_limit_bytes=_VMEM_LIMIT),
        cost_estimate=moe_cost,
    )(order_flat, counts_flat, y, g2, slot_gates, w13b, w2b)
    return z


# --------------------------------------------------------------------------
# pure-JAX references (same math, same bf16-operand / f32-accumulate policy).
# Staged: (1) attention vs. x, (2) MoE applied to the KERNEL's y (same router
# helper), so discrete top-k decisions cannot diverge from rounding.
# --------------------------------------------------------------------------
def ref_attn_residual(x, p, *, num_heads):
    f32, bf = jnp.float32, jnp.bfloat16
    B, S, D = x.shape
    H, dk = num_heads, D // num_heads
    scale = 1.0 / math.sqrt(dk)

    xn = _rmsnorm(x, p["g1"]).astype(bf)
    q = jnp.einsum("bsd,kd->bsk", xn, p["wq"].astype(bf), preferred_element_type=f32)
    k = jnp.einsum("bsd,kd->bsk", xn, p["wk"].astype(bf), preferred_element_type=f32)
    v = jnp.einsum("bsd,kd->bsk", xn, p["wv"].astype(bf), preferred_element_type=f32)
    q = _rmsnorm(q, p["gqk"]) * scale
    k = _rmsnorm(k, p["gqk"])
    qh = q.reshape(B, S, H, dk).transpose(0, 2, 1, 3).astype(bf)
    kh = k.reshape(B, S, H, dk).transpose(0, 2, 1, 3).astype(bf)
    vh = v.reshape(B, S, H, dk).transpose(0, 2, 1, 3).astype(bf)
    s = jnp.einsum("bhqd,bhkd->bhqk", qh, kh, preferred_element_type=f32)
    causal = jnp.tril(jnp.ones((S, S), bool))
    s = jnp.where(causal, s, -jnp.inf)
    p_un = jnp.exp(s - jnp.max(s, axis=-1, keepdims=True))
    l = jnp.sum(p_un, axis=-1, keepdims=True)
    attn = jnp.einsum("bhqk,bhkd->bhqd", p_un.astype(bf), vh,
                      preferred_element_type=f32) / l
    concat = attn.transpose(0, 2, 1, 3).reshape(B, S, D).astype(bf)
    out = jnp.einsum("bsk,dk->bsd", concat, p["wo"].astype(bf),
                     preferred_element_type=f32)
    return x + out


def ref_moe_residual(y, p, noise, *, num_experts, top_k):
    f32, bf = jnp.float32, jnp.bfloat16
    gates, _ = _router_gates(y, p["g2"], p["wg"], p["wn"], noise, top_k)
    yn = _rmsnorm(y, p["g2"])
    ynb = yn.astype(bf)
    ans = jnp.zeros_like(yn)
    for e in range(num_experts):
        h1 = jnp.einsum("bsd,fd->bsf", ynb, p["w1"][e].astype(bf),
                        preferred_element_type=f32)
        h3 = jnp.einsum("bsd,fd->bsf", ynb, p["w3"][e].astype(bf),
                        preferred_element_type=f32)
        g = (h1 * jax.nn.sigmoid(h1)) * h3
        oe = jnp.einsum("bsf,df->bsd", g.astype(bf), p["w2"][e].astype(bf),
                        preferred_element_type=f32)
        ans = ans + gates[..., e:e + 1] * oe
    return y + ans


# --------------------------------------------------------------------------
# parameter init (deterministic, mirrors Linear's trunc_normal init)
# --------------------------------------------------------------------------
def _trunc_normal(key, shape, fan_in, fan_out):
    std = (2.0 / (fan_in + fan_out)) ** 0.5
    return std * jax.random.truncated_normal(key, -3.0, 3.0, shape, jnp.float32)


if __name__ == "__main__":
    B, S, D = 2, 8, 32
    NUM_HEADS, NUM_EXPERTS, TOP_K = 2, 4, 2
    D_FF_EXPERT = int(8 / 3 * D)          # SparseMoE ignores the d_ff argument

    root = jax.random.PRNGKey(0)
    kx, kn, kq, kk, kv, ko, kg, knz, k1, k3, k2 = jax.random.split(root, 11)

    x = jax.random.normal(kx, (B, S, D), jnp.float32)
    noise = jax.random.normal(kn, (B, S, NUM_EXPERTS), jnp.float32)  # router noise

    params = {
        "g1": jnp.ones((1, D), jnp.float32),
        "g2": jnp.ones((1, D), jnp.float32),
        "gqk": jnp.ones((1, D), jnp.float32),
        "wq": _trunc_normal(kq, (D, D), D, D),
        "wk": _trunc_normal(kk, (D, D), D, D),
        "wv": _trunc_normal(kv, (D, D), D, D),
        "wo": _trunc_normal(ko, (D, D), D, D),
        "wg": _trunc_normal(kg, (NUM_EXPERTS, D), D, NUM_EXPERTS),
        "wn": _trunc_normal(knz, (NUM_EXPERTS, D), D, NUM_EXPERTS),
        "w1": _trunc_normal(k1, (NUM_EXPERTS, D_FF_EXPERT, D), D, D_FF_EXPERT),
        "w3": _trunc_normal(k3, (NUM_EXPERTS, D_FF_EXPERT, D), D, D_FF_EXPERT),
        "w2": _trunc_normal(k2, (NUM_EXPERTS, D, D_FF_EXPERT), D_FF_EXPERT, D),
    }

    # --- Pallas kernels ---
    y = attn_residual(x, params["g1"], params["wq"], params["wk"],
                      params["wv"], params["wo"], params["gqk"],
                      num_heads=NUM_HEADS)
    y = jax.block_until_ready(y)
    z = moe_residual(y, params["g2"], params["wg"], params["wn"], noise,
                     params["w1"], params["w3"], params["w2"],
                     num_experts=NUM_EXPERTS, top_k=TOP_K)
    z = jax.block_until_ready(z)

    # --- staged verification against matching-precision references ---
    y_ref = ref_attn_residual(x, params, num_heads=NUM_HEADS)
    z_ref = ref_moe_residual(y, params, noise,
                             num_experts=NUM_EXPERTS, top_k=TOP_K)

    assert y.shape == (B, S, D) and z.shape == (B, S, D)
    assert bool(jnp.all(jnp.isfinite(y))) and bool(jnp.all(jnp.isfinite(z)))
    assert bool(jnp.allclose(y, y_ref, atol=2e-2, rtol=2e-2)), \
        f"attn max abs err {float(jnp.max(jnp.abs(y - y_ref)))}"
    assert bool(jnp.allclose(z, z_ref, atol=2e-2, rtol=2e-2)), \
        f"moe max abs err {float(jnp.max(jnp.abs(z - z_ref)))}"

    print("KERNEL_OK")
</pallas_src>

<mosaic_0001>
module attributes {stable_mosaic.version = 11 : i64} {
  func.func @qkv_project_kernel(%arg0: i32, %arg1: i32, %arg2: memref<1x8x32xf32, #tpu.memory_space<vmem>>, %arg3: memref<1x32xf32, #tpu.memory_space<vmem>>, %arg4: memref<1x32xf32, #tpu.memory_space<vmem>>, %arg5: memref<96x32xbf16, #tpu.memory_space<vmem>>, %arg6: memref<1x2x8x16xbf16, #tpu.memory_space<vmem>>, %arg7: memref<1x2x8x16xbf16, #tpu.memory_space<vmem>>, %arg8: memref<1x2x8x16xbf16, #tpu.memory_space<vmem>>) attributes {dimension_semantics = [#tpu.dimension_semantics<parallel>, #tpu.dimension_semantics<parallel>], iteration_bounds = array<i64: 2, 1>, scalar_prefetch = 0 : i64, scratch_operands = 0 : i64, tpu.core_type = #tpu.core_type<tc>, window_params = [{transform_indices = @transform_0, window_bounds = array<i64: 1, 8, 32>}, {pipeline_mode = #tpu.pipeline_mode<synchronous>, transform_indices = @transform_1, window_bounds = array<i64: 1, 32>}, {pipeline_mode = #tpu.pipeline_mode<synchronous>, transform_indices = @transform_2, window_bounds = array<i64: 1, 32>}, {pipeline_mode = #tpu.pipeline_mode<synchronous>, transform_indices = @transform_3, window_bounds = array<i64: 96, 32>}, {transform_indices = @transform_4, window_bounds = array<i64: 1, 2, 8, 16>}, {transform_indices = @transform_5, window_bounds = array<i64: 1, 2, 8, 16>}, {transform_indices = @transform_6, window_bounds = array<i64: 1, 2, 8, 16>}]} {
    %c0 = arith.constant 0 : index
    %c0_0 = arith.constant 0 : index
    %c0_1 = arith.constant 0 : index
    %0 = vector.load %arg2[%c0, %c0_0, %c0_1] : memref<1x8x32xf32, #tpu.memory_space<vmem>>, vector<1x8x32xf32>
    %1 = vector.shape_cast %0 : vector<1x8x32xf32> to vector<8x32xf32>
    %c0_2 = arith.constant 0 : index
    %c0_3 = arith.constant 0 : index
    %2 = vector.load %arg3[%c0_2, %c0_3] : memref<1x32xf32, #tpu.memory_space<vmem>>, vector<1x32xf32>
    %3 = arith.mulf %1, %1 : vector<8x32xf32>
    %cst = arith.constant dense<0.000000e+00> : vector<8xf32>
    %4 = vector.multi_reduction <add>, %3, %cst [1] : vector<8x32xf32> to vector<8xf32>
    %5 = vector.shape_cast %4 : vector<8xf32> to vector<8x1xf32>
    %cst_4 = arith.constant 3.200000e+01 : f32
    %6 = vector.broadcast %cst_4 : f32 to vector<8x1xf32>
    %7 = arith.divf %5, %6 : vector<8x1xf32>
    %cst_5 = arith.constant 9.99999974E-6 : f32
    %8 = vector.broadcast %cst_5 : f32 to vector<8x1xf32>
    %9 = arith.addf %7, %8 : vector<8x1xf32>
    %10 = math.sqrt %9 : vector<8x1xf32>
    %11 = vector.broadcast %10 : vector<8x1xf32> to vector<8x32xf32>
    %12 = arith.divf %1, %11 : vector<8x32xf32>
    %13 = vector.broadcast %2 : vector<1x32xf32> to vector<8x32xf32>
    %14 = arith.mulf %12, %13 : vector<8x32xf32>
    %15 = arith.truncf %14 : vector<8x32xf32> to vector<8x32xbf16>
    %c0_6 = arith.constant 0 : index
    %c0_7 = arith.constant 0 : index
    %16 = vector.load %arg5[%c0_6, %c0_7] : memref<96x32xbf16, #tpu.memory_space<vmem>>, vector<96x32xbf16>
    %cst_8 = arith.constant dense<0.000000e+00> : vector<8x96xf32>
    %17 = tpu.matmul %15, %16, %cst_8 {dimension_numbers = #tpu.dot_dimension_numbers<[1], [1], [0], [0], [0, 0, 1, 0], [], []>} : vector<8x32xbf16>, vector<96x32xbf16>, vector<8x96xf32> -> vector<8x96xf32>
    %18 = vector.extract_strided_slice %17 {offsets = [0, 0], sizes = [8, 32], strides = [1, 1]} : vector<8x96xf32> to vector<8x32xf32>
    %c0_9 = arith.constant 0 : index
    %c0_10 = arith.constant 0 : index
    %19 = vector.load %arg4[%c0_9, %c0_10] : memref<1x32xf32, #tpu.memory_space<vmem>>, vector<1x32xf32>
    %20 = arith.mulf %18, %18 : vector<8x32xf32>
    %cst_11 = arith.constant dense<0.000000e+00> : vector<8xf32>
    %21 = vector.multi_reduction <add>, %20, %cst_11 [1] : vector<8x32xf32> to vector<8xf32>
    %22 = vector.shape_cast %21 : vector<8xf32> to vector<8x1xf32>
    %cst_12 = arith.constant 3.200000e+01 : f32
    %23 = vector.broadcast %cst_12 : f32 to vector<8x1xf32>
    %24 = arith.divf %22, %23 : vector<8x1xf32>
    %cst_13 = arith.constant 9.99999974E-6 : f32
    %25 = vector.broadcast %cst_13 : f32 to vector<8x1xf32>
    %26 = arith.addf %24, %25 : vector<8x1xf32>
    %27 = math.sqrt %26 : vector<8x1xf32>
    %28 = vector.broadcast %27 : vector<8x1xf32> to vector<8x32xf32>
    %29 = arith.divf %18, %28 : vector<8x32xf32>
    %30 = vector.broadcast %19 : vector<1x32xf32> to vector<8x32xf32>
    %31 = arith.mulf %29, %30 : vector<8x32xf32>
    %cst_14 = arith.constant 2.500000e-01 : f32
    %32 = vector.broadcast %cst_14 : f32 to vector<8x32xf32>
    %33 = arith.mulf %31, %32 : vector<8x32xf32>
    %34 = vector.extract_strided_slice %17 {offsets = [0, 32], sizes = [8, 32], strides = [1, 1]} : vector<8x96xf32> to vector<8x32xf32>
    %c0_15 = arith.constant 0 : index
    %c0_16 = arith.constant 0 : index
    %35 = vector.load %arg4[%c0_15, %c0_16] : memref<1x32xf32, #tpu.memory_space<vmem>>, vector<1x32xf32>
    %36 = arith.mulf %34, %34 : vector<8x32xf32>
    %cst_17 = arith.constant dense<0.000000e+00> : vector<8xf32>
    %37 = vector.multi_reduction <add>, %36, %cst_17 [1] : vector<8x32xf32> to vector<8xf32>
    %38 = vector.shape_cast %37 : vector<8xf32> to vector<8x1xf32>
    %cst_18 = arith.constant 3.200000e+01 : f32
    %39 = vector.broadcast %cst_18 : f32 to vector<8x1xf32>
    %40 = arith.divf %38, %39 : vector<8x1xf32>
    %cst_19 = arith.constant 9.99999974E-6 : f32
    %41 = vector.broadcast %cst_19 : f32 to vector<8x1xf32>
    %42 = arith.addf %40, %41 : vector<8x1xf32>
    %43 = math.sqrt %42 : vector<8x1xf32>
    %44 = vector.broadcast %43 : vector<8x1xf32> to vector<8x32xf32>
    %45 = arith.divf %34, %44 : vector<8x32xf32>
    %46 = vector.broadcast %35 : vector<1x32xf32> to vector<8x32xf32>
    %47 = arith.mulf %45, %46 : vector<8x32xf32>
    %48 = vector.extract_strided_slice %17 {offsets = [0, 64], sizes = [8, 32], strides = [1, 1]} : vector<8x96xf32> to vector<8x32xf32>
    %49 = vector.extract_strided_slice %33 {offsets = [0, 0], sizes = [8, 16], strides = [1, 1]} : vector<8x32xf32> to vector<8x16xf32>
    %50 = arith.truncf %49 : vector<8x16xf32> to vector<8x16xbf16>
    %c0_20 = arith.constant 0 : index
    %c0_21 = arith.constant 0 : index
    %c0_22 = arith.constant 0 : index
    %c0_23 = arith.constant 0 : index
    %51 = vector.load %arg6[%c0_20, %c0_21, %c0_22, %c0_23] : memref<1x2x8x16xbf16, #tpu.memory_space<vmem>>, vector<1x1x8x16xbf16>
    %52 = vector.shape_cast %51 : vector<1x1x8x16xbf16> to vector<8x16xbf16>
    %53 = vector.shape_cast %50 : vector<8x16xbf16> to vector<1x1x8x16xbf16>
    tpu.vector_store %arg6[%c0_20, %c0_21, %c0_22, %c0_23], %53 {strides = array<i32>} : memref<1x2x8x16xbf16, #tpu.memory_space<vmem>>, vector<1x1x8x16xbf16>,
    %54 = vector.extract_strided_slice %47 {offsets = [0, 0], sizes = [8, 16], strides = [1, 1]} : vector<8x32xf32> to vector<8x16xf32>
    %55 = arith.truncf %54 : vector<8x16xf32> to vector<8x16xbf16>
    %c0_24 = arith.constant 0 : index
    %c0_25 = arith.constant 0 : index
    %c0_26 = arith.constant 0 : index
    %c0_27 = arith.constant 0 : index
    %56 = vector.load %arg7[%c0_24, %c0_25, %c0_26, %c0_27] : memref<1x2x8x16xbf16, #tpu.memory_space<vmem>>, vector<1x1x8x16xbf16>
    %57 = vector.shape_cast %56 : vector<1x1x8x16xbf16> to vector<8x16xbf16>
    %58 = vector.shape_cast %55 : vector<8x16xbf16> to vector<1x1x8x16xbf16>
    tpu.vector_store %arg7[%c0_24, %c0_25, %c0_26, %c0_27], %58 {strides = array<i32>} : memref<1x2x8x16xbf16, #tpu.memory_space<vmem>>, vector<1x1x8x16xbf16>,
    %59 = vector.extract_strided_slice %48 {offsets = [0, 0], sizes = [8, 16], strides = [1, 1]} : vector<8x32xf32> to vector<8x16xf32>
    %60 = arith.truncf %59 : vector<8x16xf32> to vector<8x16xbf16>
    %c0_28 = arith.constant 0 : index
    %c0_29 = arith.constant 0 : index
    %c0_30 = arith.constant 0 : index
    %c0_31 = arith.constant 0 : index
    %61 = vector.load %arg8[%c0_28, %c0_29, %c0_30, %c0_31] : memref<1x2x8x16xbf16, #tpu.memory_space<vmem>>, vector<1x1x8x16xbf16>
    %62 = vector.shape_cast %61 : vector<1x1x8x16xbf16> to vector<8x16xbf16>
    %63 = vector.shape_cast %60 : vector<8x16xbf16> to vector<1x1x8x16xbf16>
    tpu.vector_store %arg8[%c0_28, %c0_29, %c0_30, %c0_31], %63 {strides = array<i32>} : memref<1x2x8x16xbf16, #tpu.memory_space<vmem>>, vector<1x1x8x16xbf16>,
    %64 = vector.extract_strided_slice %33 {offsets = [0, 16], sizes = [8, 16], strides = [1, 1]} : vector<8x32xf32> to vector<8x16xf32>
    %65 = arith.truncf %64 : vector<8x16xf32> to vector<8x16xbf16>
    %c0_32 = arith.constant 0 : index
    %c1 = arith.constant 1 : index
    %c0_33 = arith.constant 0 : index
    %c0_34 = arith.constant 0 : index
    %66 = vector.load %arg6[%c0_32, %c1, %c0_33, %c0_34] : memref<1x2x8x16xbf16, #tpu.memory_space<vmem>>, vector<1x1x8x16xbf16>
    %67 = vector.shape_cast %66 : vector<1x1x8x16xbf16> to vector<8x16xbf16>
    %68 = vector.shape_cast %65 : vector<8x16xbf16> to vector<1x1x8x16xbf16>
    tpu.vector_store %arg6[%c0_32, %c1, %c0_33, %c0_34], %68 {strides = array<i32>} : memref<1x2x8x16xbf16, #tpu.memory_space<vmem>>, vector<1x1x8x16xbf16>,
    %69 = vector.extract_strided_slice %47 {offsets = [0, 16], sizes = [8, 16], strides = [1, 1]} : vector<8x32xf32> to vector<8x16xf32>
    %70 = arith.truncf %69 : vector<8x16xf32> to vector<8x16xbf16>
    %c0_35 = arith.constant 0 : index
    %c1_36 = arith.constant 1 : index
    %c0_37 = arith.constant 0 : index
    %c0_38 = arith.constant 0 : index
    %71 = vector.load %arg7[%c0_35, %c1_36, %c0_37, %c0_38] : memref<1x2x8x16xbf16, #tpu.memory_space<vmem>>, vector<1x1x8x16xbf16>
    %72 = vector.shape_cast %71 : vector<1x1x8x16xbf16> to vector<8x16xbf16>
    %73 = vector.shape_cast %70 : vector<8x16xbf16> to vector<1x1x8x16xbf16>
    tpu.vector_store %arg7[%c0_35, %c1_36, %c0_37, %c0_38], %73 {strides = array<i32>} : memref<1x2x8x16xbf16, #tpu.memory_space<vmem>>, vector<1x1x8x16xbf16>,
    %74 = vector.extract_strided_slice %48 {offsets = [0, 16], sizes = [8, 16], strides = [1, 1]} : vector<8x32xf32> to vector<8x16xf32>
    %75 = arith.truncf %74 : vector<8x16xf32> to vector<8x16xbf16>
    %c0_39 = arith.constant 0 : index
    %c1_40 = arith.constant 1 : index
    %c0_41 = arith.constant 0 : index
    %c0_42 = arith.constant 0 : index
    %76 = vector.load %arg8[%c0_39, %c1_40, %c0_41, %c0_42] : memref<1x2x8x16xbf16, #tpu.memory_space<vmem>>, vector<1x1x8x16xbf16>
    %77 = vector.shape_cast %76 : vector<1x1x8x16xbf16> to vector<8x16xbf16>
    %78 = vector.shape_cast %75 : vector<8x16xbf16> to vector<1x1x8x16xbf16>
    tpu.vector_store %arg8[%c0_39, %c1_40, %c0_41, %c0_42], %78 {strides = array<i32>} : memref<1x2x8x16xbf16, #tpu.memory_space<vmem>>, vector<1x1x8x16xbf16>,
    return
  }
  func.func @transform_0(%arg0: i32, %arg1: i32) -> (i32, i32, i32) {
    %c0_i32 = arith.constant 0 : i32
    %c0_i32_0 = arith.constant 0 : i32
    return %arg0, %arg1, %c0_i32 : i32, i32, i32
  }
  func.func @transform_1(%arg0: i32, %arg1: i32) -> (i32, i32) {
    %c0_i32 = arith.constant 0 : i32
    %c0_i32_0 = arith.constant 0 : i32
    %c0_i32_1 = arith.constant 0 : i32
    return %c0_i32, %c0_i32_0 : i32, i32
  }
  func.func @transform_2(%arg0: i32, %arg1: i32) -> (i32, i32) {
    %c0_i32 = arith.constant 0 : i32
    %c0_i32_0 = arith.constant 0 : i32
    %c0_i32_1 = arith.constant 0 : i32
    return %c0_i32, %c0_i32_0 : i32, i32
  }
  func.func @transform_3(%arg0: i32, %arg1: i32) -> (i32, i32) {
    %c0_i32 = arith.constant 0 : i32
    %c0_i32_0 = arith.constant 0 : i32
    %c0_i32_1 = arith.constant 0 : i32
    return %c0_i32, %c0_i32_0 : i32, i32
  }
  func.func @transform_4(%arg0: i32, %arg1: i32) -> (i32, i32, i32, i32) {
    %c0_i32 = arith.constant 0 : i32
    %c0_i32_0 = arith.constant 0 : i32
    %c0_i32_1 = arith.constant 0 : i32
    return %arg0, %c0_i32, %arg1, %c0_i32_0 : i32, i32, i32, i32
  }
  func.func @transform_5(%arg0: i32, %arg1: i32) -> (i32, i32, i32, i32) {
    %c0_i32 = arith.constant 0 : i32
    %c0_i32_0 = arith.constant 0 : i32
    %c0_i32_1 = arith.constant 0 : i32
    return %arg0, %c0_i32, %arg1, %c0_i32_0 : i32, i32, i32, i32
  }
  func.func @transform_6(%arg0: i32, %arg1: i32) -> (i32, i32, i32, i32) {
    %c0_i32 = arith.constant 0 : i32
    %c0_i32_0 = arith.constant 0 : i32
    %c0_i32_1 = arith.constant 0 : i32
    return %arg0, %c0_i32, %arg1, %c0_i32_0 : i32, i32, i32, i32
  }
}

</mosaic_0001>

<llo_original>
// kernel: tpu_custom_call.1
$region0: #{tpu_custom_call.1}
  #allocation0 [shape = 'u32[]', space=smem, size = 0x4, offset = 0x4, fixed_abs, tag = 'smem constant byte address 0x4 - core index']
  #allocation1 [shape = 'u32[144,128]{1,0:T(1,128)}', space=vmem, size = 0x12000, scoped, tag = 'internal scratch']
  %s0 = inlined_call_operand.vmem [shape: f32[2,8,32], index: 0, kind: input, shape index: {}]
  %s1 = inlined_call_operand.vmem [shape: f32[1,32], index: 1, kind: input, shape index: {}]
  %s2 = inlined_call_operand.vmem [shape: f32[1,32], index: 2, kind: input, shape index: {}]
  %s3 = inlined_call_operand.vmem [shape: bf16[96,32], index: 3, kind: input, shape index: {}]
  %s4 = inlined_call_operand.hbm [shape: bf16[2,2,8,16], index: 4, kind: output, shape index: {0}]
  %s5 = inlined_call_operand.hbm [shape: bf16[2,2,8,16], index: 5, kind: output, shape index: {1}]
  %s6 = inlined_call_operand.hbm [shape: bf16[2,2,8,16], index: 6, kind: output, shape index: {2}]
  %7 = xla_tuple %s4, %s5, %s6
  %s8 = sld [smem:[#allocation0]]
  $region65: #{tpu_custom_call.1} parent=0
    _
  %s10 = ssub.s32 1, %s8
  %s11 = scalar_select 0, %s10, %s8
  $region1: #{tpu_custom_call.1} parent=0
    #allocation2 [shape = 'u8[8192]{0}', space=vmem, size = 0x2000, scoped, tag = 'output window, operand 0']
    #allocation3 [shape = 's32[2]{0}', space=sflag, size = 0x8, scoped, tag = 'scoped memory for tpu_custom_call.1']
    #allocation4 [shape = 'u8[8192]{0}', space=vmem, size = 0x2000, scoped, tag = 'output window, operand 1']
    #allocation5 [shape = 's32[2]{0}', space=sflag, size = 0x8, scoped, tag = 'scoped memory for tpu_custom_call.1']
    #allocation6 [shape = 'u8[8192]{0}', space=vmem, size = 0x2000, scoped, tag = 'output window, operand 2']
    %12 = vsyncpa [#allocation3], 0
    %s13 = scalar_lea.sflag [#allocation3], 1
    %14 = vsyncpa %s13, 0
    %15 = vsyncpa [#allocation5], 0
    %s16 = scalar_lea.sflag [#allocation5], 1
    %17 = vsyncpa %s16, 0
    loop: start=0, step=1, limit=4
    $region2: #{tpu_custom_call.1} parent=1 // loop_pre_header
      _
    $region3: #{tpu_custom_call.1} parent=1 // loop_header
      %s19 = sphi 0, %s23
      %p20 = scmp.ge.s32.totalorder %s19, 4
      %s26 = sphi 0, %s38
      %s27 = sphi 0, %s34
      %s28 = sphi 0, %s26
      %s29 = sphi 0, %s27
      %s30 = sphi 0, %s28
      %s31 = sphi 0, %s29
      %s43 = sphi 0, %s45
      %s46 = sphi 0, %s43
      %s47 = sphi 0, %s46
      %s63 = sphi 0, %s47
      %s67 = sphi 0, %s67
      %s69 = sphi 0, %s67
      %s70 = sphi 0, %s69
      %s84 = sphi 0, %s70
      %s88 = sphi 0, %s88
      %s90 = sphi 0, %s88
      %s91 = sphi 0, %s90
      %s105 = sphi 0, %s91
      %s109 = sphi 0, %s109
      %s111 = sphi 0, %s109
      %s112 = sphi 0, %s111
      %s126 = sphi 0, %s112
      %s134 = sphi 0, %s136
      %s137 = sphi 0, %s134
      %s138 = sphi 0, %s137
      %s154 = sphi 0, %s138
      %s162 = sphi 0, %s164
      %s165 = sphi 0, %s162
      %s166 = sphi 0, %s165
      %s182 = sphi 0, %s166
      %s190 = sphi 0, %s192
      %s193 = sphi 0, %s190
      %s194 = sphi 0, %s193
      %s210 = sphi 0, %s194
    $region4: #{tpu_custom_call.1} parent=1 // loop_header_branch
      %22 = sbr.rel (%p20) target = $region8
    $region5: #{tpu_custom_call.1} parent=1 // loop_body
      %s24 = ssub.s32 %s19, 1
      %s25 = ssub.s32 %s19, 2
      %s32 = sadd.s32 1, %s27
      %p33 = scmp.ge.s32.totalorder %s32, 1
      %s34 = scalar_select %p33, 0, %s32
      %s35 = sadd.s32 1, %s26
      %s36 = scalar_select %p33, %s35, %s26
      %p37 = scmp.ge.s32.totalorder %s36, 2
      %s38 = scalar_select %p37, 0, %s36
      %s39 = ssub.s32 %s26, %s38
      %s40 = ssub.s32 %s27, %s34
      %s41 = sor.u32 %s39, %s40
      %p42 = scmp.eq.s32.totalorder %s41, 0
      %s44 = sadd.s32 %s43, 1
      %s45 = scalar_select %p42, %s43, %s44
      %p48 = pneg %p42
      %p49 = scmp.eq.s32.totalorder %s19, 1
      %p50 = por %p48, %p49
      %p51 = scmp.ne.s32.totalorder %s43, %s46
      %p52 = scmp.eq.s32.totalorder %s19, 0
      %p53 = por %p51, %p52
      %p54 = scmp.ne.s32.totalorder %s43, %s46
      %p55 = scmp.eq.s32.totalorder %s24, 1
      %p56 = por %p54, %p55
      %p57 = scmp.ne.s32.totalorder %s46, %s47
      %p58 = scmp.eq.s32.totalorder %s24, 0
      %p59 = por %p57, %p58
      %p60 = scmp.ne.s32.totalorder %s46, %s47
      %p61 = scmp.eq.s32.totalorder %s25, 1
      %p62 = por %p60, %p61
      %p64 = scmp.ne.s32.totalorder %s47, %s63
      %p65 = scmp.eq.s32.totalorder %s25, 0
      %p66 = por %p64, %p65
      %s68 = sadd.s32 %s67, 1
      %p71 = scmp.eq.s32.totalorder %s19, 1
      %p72 = scmp.ne.s32.totalorder %s67, %s69
      %p73 = scmp.eq.s32.totalorder %s19, 0
      %p74 = por %p72, %p73
      %p75 = scmp.ne.s32.totalorder %s67, %s69
      %p76 = scmp.eq.s32.totalorder %s24, 1
      %p77 = por %p75, %p76
      %p78 = scmp.ne.s32.totalorder %s69, %s70
      %p79 = scmp.eq.s32.totalorder %s24, 0
      %p80 = por %p78, %p79
      %p81 = scmp.ne.s32.totalorder %s69, %s70
      %p82 = scmp.eq.s32.totalorder %s25, 1
      %p83 = por %p81, %p82
      %p85 = scmp.ne.s32.totalorder %s70, %s84
      %p86 = scmp.eq.s32.totalorder %s25, 0
      %p87 = por %p85, %p86
      %s89 = sadd.s32 %s88, 1
      %p92 = scmp.eq.s32.totalorder %s19, 1
      %p93 = scmp.ne.s32.totalorder %s88, %s90
      %p94 = scmp.eq.s32.totalorder %s19, 0
      %p95 = por %p93, %p94
      %p96 = scmp.ne.s32.totalorder %s88, %s90
      %p97 = scmp.eq.s32.totalorder %s24, 1
      %p98 = por %p96, %p97
      %p99 = scmp.ne.s32.totalorder %s90, %s91
      %p100 = scmp.eq.s32.totalorder %s24, 0
      %p101 = por %p99, %p100
      %p102 = scmp.ne.s32.totalorder %s90, %s91
      %p103 = scmp.eq.s32.totalorder %s25, 1
      %p104 = por %p102, %p103
      %p106 = scmp.ne.s32.totalorder %s91, %s105
      %p107 = scmp.eq.s32.totalorder %s25, 0
      %p108 = por %p106, %p107
      %s110 = sadd.s32 %s109, 1
      %p113 = scmp.eq.s32.totalorder %s19, 1
      %p114 = scmp.ne.s32.totalorder %s109, %s111
      %p115 = scmp.eq.s32.totalorder %s19, 0
      %p116 = por %p114, %p115
      %p117 = scmp.ne.s32.totalorder %s109, %s111
      %p118 = scmp.eq.s32.totalorder %s24, 1
      %p119 = por %p117, %p118
      %p120 = scmp.ne.s32.totalorder %s111, %s112
      %p121 = scmp.eq.s32.totalorder %s24, 0
      %p122 = por %p120, %p121
      %p123 = scmp.ne.s32.totalorder %s111, %s112
      %p124 = scmp.eq.s32.totalorder %s25, 1
      %p125 = por %p123, %p124
      %p127 = scmp.ne.s32.totalorder %s112, %s126
      %p128 = scmp.eq.s32.totalorder %s25, 0
      %p129 = por %p127, %p128
      %s130 = ssub.s32 %s26, %s38
      %s131 = ssub.s32 %s27, %s34
      %s132 = sor.u32 %s130, %s131
      %p133 = scmp.eq.s32.totalorder %s132, 0
      %s135 = sadd.s32 %s134, 1
      %s136 = scalar_select %p133, %s134, %s135
      %p139 = pneg %p133
      %p140 = scmp.eq.s32.totalorder %s19, 1
      %p141 = por %p139, %p140
      %p142 = scmp.ne.s32.totalorder %s134, %s137
      %p143 = scmp.eq.s32.totalorder %s19, 0
      %p144 = por %p142, %p143
      %p145 = scmp.ne.s32.totalorder %s134, %s137
      %p146 = scmp.eq.s32.totalorder %s24, 1
      %p147 = por %p145, %p146
      %p148 = scmp.ne.s32.totalorder %s137, %s138
      %p149 = scmp.eq.s32.totalorder %s24, 0
      %p150 = por %p148, %p149
      %p151 = scmp.ne.s32.totalorder %s137, %s138
      %p152 = scmp.eq.s32.totalorder %s25, 1
      %p153 = por %p151, %p152
      %p155 = scmp.ne.s32.totalorder %s138, %s154
      %p156 = scmp.eq.s32.totalorder %s25, 0
      %p157 = por %p155, %p156
      %s158 = ssub.s32 %s26, %s38
      %s159 = ssub.s32 %s27, %s34
      %s160 = sor.u32 %s158, %s159
      %p161 = scmp.eq.s32.totalorder %s160, 0
      %s163 = sadd.s32 %s162, 1
      %s164 = scalar_select %p161, %s162, %s163
      %p167 = pneg %p161
      %p168 = scmp.eq.s32.totalorder %s19, 1
      %p169 = por %p167, %p168
      %p170 = scmp.ne.s32.totalorder %s162, %s165
      %p171 = scmp.eq.s32.totalorder %s19, 0
      %p172 = por %p170, %p171
      %p173 = scmp.ne.s32.totalorder %s162, %s165
      %p174 = scmp.eq.s32.totalorder %s24, 1
      %p175 = por %p173, %p174
      %p176 = scmp.ne.s32.totalorder %s165, %s166
      %p177 = scmp.eq.s32.totalorder %s24, 0
      %p178 = por %p176, %p177
      %p179 = scmp.ne.s32.totalorder %s165, %s166
      %p180 = scmp.eq.s32.totalorder %s25, 1
      %p181 = por %p179, %p180
      %p183 = scmp.ne.s32.totalorder %s166, %s182
      %p184 = scmp.eq.s32.totalorder %s25, 0
      %p185 = por %p183, %p184
      %s186 = ssub.s32 %s26, %s38
      %s187 = ssub.s32 %s27, %s34
      %s188 = sor.u32 %s186, %s187
      %p189 = scmp.eq.s32.totalorder %s188, 0
      %s191 = sadd.s32 %s190, 1
      %s192 = scalar_select %p189, %s190, %s191
      %p195 = pneg %p189
      %p196 = scmp.eq.s32.totalorder %s19, 1
      %p197 = por %p195, %p196
      %p198 = scmp.ne.s32.totalorder %s190, %s193
      %p199 = scmp.eq.s32.totalorder %s19, 0
      %p200 = por %p198, %p199
      %p201 = scmp.ne.s32.totalorder %s190, %s193
      %p202 = scmp.eq.s32.totalorder %s24, 1
      %p203 = por %p201, %p202
      %p204 = scmp.ne.s32.totalorder %s193, %s194
      %p205 = scmp.eq.s32.totalorder %s24, 0
      %p206 = por %p204, %p205
      %p207 = scmp.ne.s32.totalorder %s193, %s194
      %p208 = scmp.eq.s32.totalorder %s25, 1
      %p209 = por %p207, %p208
      %p211 = scmp.ne.s32.totalorder %s194, %s210
      %p212 = scmp.eq.s32.totalorder %s25, 0
      %p213 = por %p211, %p212
      %p214 = scmp.le.s32.totalorder 1, %s19
      %p215 = scmp.lt.s32.totalorder %s19, 3
      %p216 = pnand %p214, %p215
      %p217 = pneg %p216
      // Predicated region
      $region9: #{tpu_custom_call.1} parent=5 // pred_check
        _
      $region10: #{tpu_custom_call.1} parent=5 // pred_check_branch
        %219 = sbr.rel (%p216) target = $region12
      $region11: #{tpu_custom_call.1} parent=5 // pred_region
        %s220 = ssub.s32 %s19, 1
        // Predicated region
        $region13: #{tpu_custom_call.1} parent=11 // pred_check
          %p221 = pneg %p80
        $region14: #{tpu_custom_call.1} parent=11 // pred_check_branch
          %223 = sbr.rel (%p221) target = $region16
        $region15: #{tpu_custom_call.1} parent=11 // pred_region
          _
        $region16: #{tpu_custom_call.1} parent=11 // pred_fallthru
          _
        // Predicated region
        $region17: #{tpu_custom_call.1} parent=11 // pred_check
          %p224 = pneg %p101
        $region18: #{tpu_custom_call.1} parent=11 // pred_check_branch
          %226 = sbr.rel (%p224) target = $region20
        $region19: #{tpu_custom_call.1} parent=11 // pred_region
          _
        $region20: #{tpu_custom_call.1} parent=11 // pred_fallthru
          _
        // Predicated region
        $region21: #{tpu_custom_call.1} parent=11 // pred_check
          %p227 = pneg %p122
        $region22: #{tpu_custom_call.1} parent=11 // pred_check_branch
          %229 = sbr.rel (%p227) target = $region24
        $region23: #{tpu_custom_call.1} parent=11 // pred_region
          _
        $region24: #{tpu_custom_call.1} parent=11 // pred_fallthru
          _
      $region12: #{tpu_custom_call.1} parent=5 // pred_fallthru
        _
      %p230 = scmp.lt.s32.totalorder %s19, 2
      // Predicated region
      $region25: #{tpu_custom_call.1} parent=5 // pred_check
        %p231 = pneg %p230
      $region26: #{tpu_custom_call.1} parent=5 // pred_check_branch
        %233 = sbr.rel (%p231) target = $region28
      $region27: #{tpu_custom_call.1} parent=5 // pred_region
        // Predicated region
        $region29: #{tpu_custom_call.1} parent=27 // pred_check
          %p234 = pneg %p53
        $region30: #{tpu_custom_call.1} parent=27 // pred_check_branch
          %236 = sbr.rel (%p234) target = $region32
        $region31: #{tpu_custom_call.1} parent=27 // pred_region
          %p237 = scmp.lt.s32.totalorder %s26, 1
          %s238 = scalar_select %p237, %s26, 1
          %p239 = scmp.lt.s32.totalorder %s27, 0
          %s240 = scalar_select %p239, %s27, 0
          %s241 = sadd.s32 %s240, %s238
          %s242 = smul.addr %s241, 8
          %s243 = scalar_lea.vmem %s0, %s242
        $region32: #{tpu_custom_call.1} parent=27 // pred_fallthru
          _
      $region28: #{tpu_custom_call.1} parent=5 // pred_fallthru
        _
      %p244 = scmp.le.s32.totalorder 1, %s19
      %p245 = scmp.lt.s32.totalorder %s19, 3
      %p246 = pnand %p244, %p245
      %p247 = pneg %p246
      // Predicated region
      $region33: #{tpu_custom_call.1} parent=5 // pred_check
        _
      $region34: #{tpu_custom_call.1} parent=5 // pred_check_branch
        %249 = sbr.rel (%p246) target = $region36
      $region35: #{tpu_custom_call.1} parent=5 // pred_region
        %s250 = ssub.s32 %s19, 1
        %p251 = scmp.lt.s32.totalorder %s28, 1
        %s252 = scalar_select %p251, %s28, 1
        %p253 = scmp.lt.s32.totalorder %s29, 0
        %s254 = scalar_select %p253, %s29, 0
        %s255 = sadd.s32 %s254, %s252
        %s256 = smul.addr %s255, 8
        %s257 = scalar_lea.vmem %s0, %s256
        %p258 = pneg %p59
        %p259 = pneg %p56
        %p260 = pneg %p80
        %p261 = pneg %p77
        %p262 = pneg %p101
        %p263 = pneg %p98
        %p264 = pneg %p122
        %p265 = pneg %p119
        %p266 = pneg %p150
        %p267 = pneg %p147
        %s268 = sand.u32 %s137, 1
        %s269 = scalar_lea.sflag [#allocation3], %s268
        %s270 = sand.u32 %s137, 1
        %s271 = smul.addr %s270, 8
        %s272 = scalar_lea.vmem [#allocation2], %s271
        %p273 = pneg %p178
        %p274 = pneg %p175
        %s275 = sand.u32 %s24, 1
        %s276 = scalar_lea.sflag [#allocation5], %s275
        %s277 = sand.u32 %s165, 1
        %s278 = smul.addr %s277, 8
        %s279 = scalar_lea.vmem [#allocation4], %s278
        %p280 = pneg %p206
        %p281 = pneg %p203
        %s282 = sand.u32 %s24, 1
        %s283 = scalar_lea.sflag [#allocation5], %s282
        %s284 = sand.u32 %s193, 1
        %s285 = smul.addr %s284, 8
        %s286 = scalar_lea.vmem [#allocation6], %s285
        %p287 = scmp.lt.s32.totalorder %s28, 1
        %s288 = scalar_select %p287, %s28, 1
        %p289 = scmp.lt.s32.totalorder %s29, 0
        %s290 = scalar_select %p289, %s29, 0
        %s291 = sadd.s32 %s290, %s288
        %s292 = smul.addr %s291, 8
        %s293 = scalar_lea.vmem %s0, %s292
        %v295 = vld [vmem:[%s293] sm:$0xff]
        %v296 = vld [vmem:[%s1] sm:$0x1]
        %v297 = vmul.f32 %v295, %v295
        %vm298 = vcmask 261120
        %v299 = vsel %vm298, %v297, 0.0
        %300 = vadd.xlane.f32.xlu0 %v299
        %v301 = vpop.xlane.xlu0 %300
        %v302 = vrcp.pop 32.0
        %v303 = vmul.f32 %v301, %v302
        %v304 = vadd.f32 %v303, 1e-05
        %v305 = vrsqrt.pop %v304
        %v306 = vmul.f32 %v304, %v305
        %vm307 = vcmp.eq.f32.partialorder %v304, inf
        %v308 = vsel %vm307, %v304, %v306
        %vm309 = vcmp.eq.f32.partialorder %v304, 0.0
        %v310 = vand.u32 %v304, 2147483648
        %v311 = vsel %vm309, %v310, %v308
        %v312 = vrcp.pop %v311
        %v313 = vmul.f32 %v295, %v312
        %v315 = vlaneseq
        %v316 = vshrl.u32 %v315, 7
        %v317 = vsub.s32 0, %v316
        %v318 = vrot.slane %v296, %v317
        %v320 = vmul.f32 %v313, %v318
        %v321 = vpack.c.bf16 %v320, %v320
        %v322 = vld [vmem:[%s3] sm:$0xf]
        %v323 = vld [vmem:[%s3 + $0x4] sm:$0xf]
        %v324 = vld [vmem:[%s3 + $0x8] sm:$0xf]
        %v325 = vld [vmem:[%s3 + $0xc] sm:$0xf]
        %v326 = vld [vmem:[%s3 + $0x10] sm:$0xf]
        %v327 = vld [vmem:[%s3 + $0x14] sm:$0xf]
        %v328 = vld [vmem:[%s3 + $0x18] sm:$0xf]
        %v329 = vld [vmem:[%s3 + $0x1c] sm:$0xf]
        %v330 = vld [vmem:[%s3 + $0x20] sm:$0xf]
        %v331 = vld [vmem:[%s3 + $0x24] sm:$0xf]
        %v332 = vld [vmem:[%s3 + $0x28] sm:$0xf]
        %v333 = vld [vmem:[%s3 + $0x2c] sm:$0xf]
        %v346 = vunpack.c.l.b16 %v322
        %v347 = vunpack.c.l.b16 %v323
        %v348 = vunpack.c.l.b16 %v324
        %v349 = vunpack.c.l.b16 %v325
        %v350 = vunpack.c.l.b16 %v326
        %v351 = vunpack.c.l.b16 %v327
        %v352 = vunpack.c.l.b16 %v328
        %v353 = vunpack.c.l.b16 %v329
        %v354 = vunpack.c.l.b16 %v330
        %v355 = vunpack.c.l.b16 %v331
        %v356 = vunpack.c.l.b16 %v332
        %v357 = vunpack.c.l.b16 %v333
        %v358 = vpack.c.b16 %v347, %v346
        %v359 = vpack.c.b16 %v349, %v348
        %v360 = vpack.c.b16 %v351, %v350
        %v361 = vpack.c.b16 %v353, %v352
        %v362 = vpack.c.b16 %v355, %v354
        %v363 = vpack.c.b16 %v357, %v356
        %v365 = vsel %vm298, %v321, 0
        %v368 = vsel %vm298, %v358, 0
        %v371 = vsel %vm298, %v359, 0
        %v374 = vsel %vm298, %v360, 0
        %v377 = vsel %vm298, %v361, 0
        %v380 = vsel %vm298, %v362, 0
        %v383 = vsel %vm298, %v363, 0
        %385 = vmatprep.subr.bf16.mxu0 0
        %386 = vmatpush1.bf16.xpose.msra.mxu0 %v368
        %387 = vmatprep.subr.bf16.mxu0 0
        %388 = vmatpush1.bf16.xpose.msra.mxu0 %v371
        %389 = vmatprep.subr.bf16.mxu0 0
        %390 = vmatpush1.bf16.xpose.msra.mxu0 %v374
        %391 = vmatprep.subr.bf16.mxu0 0
        %392 = vmatpush1.bf16.xpose.msra.mxu0 %v377
        %393 = vmatprep.subr.bf16.mxu0 0
        %394 = vmatpush1.bf16.xpose.msra.mxu0 %v380
        %395 = vmatprep.subr.bf16.mxu0 0
        %396 = vmatpush1.bf16.xpose.msra.mxu0 %v383
        %397 = vmatprep.subr.bf16.mxu0 0
        %398 = vmatpush1.bf16.xpose.msra.mxu0 0
        %399 = vmatprep.subr.bf16.mxu0 0
        %400 = vmatpush1.bf16.xpose.msra.mxu0 0
        %401 = vmatprep.subr.bf16.mxu0 0
        %402 = vmatpush1.bf16.xpose.msra.mxu0 0
        %403 = vmatprep.subr.bf16.mxu0 0
        %404 = vmatpush1.bf16.xpose.msra.mxu0 0
        %405 = vmatprep.subr.bf16.mxu0 0
        %406 = vmatpush1.bf16.xpose.msra.mxu0 0
        %407 = vmatprep.subr.bf16.mxu0 0
        %408 = vmatpush1.bf16.xpose.msra.mxu0 0
        %409 = vmatprep.subr.bf16.mxu0 0
        %410 = vmatpush1.bf16.xpose.msra.mxu0 0
        %411 = vmatprep.subr.bf16.mxu0 0
        %412 = vmatpush1.bf16.xpose.msra.mxu0 0
        %413 = vmatprep.subr.bf16.mxu0 0
        %414 = vmatpush1.bf16.xpose.msra.mxu0 0
        %415 = vmatprep.subr.bf16.mxu0 0
        %416 = vmatpush1.bf16.xpose.msra.mxu0 0
        %417 = vmatprep.mubr.bf16.mxu0 0
        %418 = vmatmul.mubr.bf16.gmra.mrb[0].mxu0 %v365
        %v419 = vpop.f32.mrb[0].mxu0
        %v420 = vadd.f32 0.0, %v419
        %v421 = vpop.f32.mrb[0].mxu0
        %v422 = vpop.f32.mrb[0].mxu0
        %v423 = vpop.f32.mrb[0].mxu0
        %424 = vdwg.mxu0
        %v425 = vld [vmem:[%s2] sm:$0x1]
        %v426 = vmul.f32 %v420, %v420
        %v427 = vsel %vm298, %v426, 0.0
        %428 = vadd.xlane.f32.xlu0 %v427
        %v429 = vpop.xlane.xlu0 %428
        %v430 = vmul.f32 %v429, %v302
        %v431 = vadd.f32 %v430, 1e-05
        %v432 = vrsqrt.pop %v431
        %v433 = vmul.f32 %v431, %v432
        %vm434 = vcmp.eq.f32.partialorder %v431, inf
        %v435 = vsel %vm434, %v431, %v433
        %vm436 = vcmp.eq.f32.partialorder %v431, 0.0
        %v437 = vand.u32 %v431, 2147483648
        %v438 = vsel %vm436, %v437, %v435
        %v439 = vrcp.pop %v438
        %v440 = vmul.f32 %v420, %v439
        %v442 = vlaneseq
        %v443 = vshrl.u32 %v442, 7
        %v444 = vsub.s32 0, %v443
        %v445 = vrot.slane %v425, %v444
        %v447 = vmul.f32 %v440, %v445
        %v448 = vmul.f32 %v447, 0.25
        %450 = vrot.lane.b32.xlu0 %v426, 96
        %v451 = vpop.permute.xlu0 %450
        %v453 = vsel %vm298, %v451, 0.0
        %454 = vadd.xlane.f32.xlu0 %v453
        %v455 = vpop.xlane.xlu0 %454
        %v456 = vmul.f32 %v455, %v302
        %v457 = vadd.f32 %v456, 1e-05
        %v458 = vrsqrt.pop %v457
        %v459 = vmul.f32 %v457, %v458
        %vm460 = vcmp.eq.f32.partialorder %v457, inf
        %v461 = vsel %vm460, %v457, %v459
        %vm462 = vcmp.eq.f32.partialorder %v457, 0.0
        %v463 = vand.u32 %v457, 2147483648
        %v464 = vsel %vm462, %v463, %v461
        %v465 = vrcp.pop %v464
        %v466 = vmul.f32 %v420, %v465
        %467 = vrot.lane.b32.xlu0 %v445, 32
        %v468 = vpop.permute.xlu0 %467
        %v470 = vmul.f32 %v466, %v468
        %v471 = vpack.c.bf16 %v448, %v448
        %vm472 = vcmask 125952
        %473 = vst.msk [vmem:[%s272] sm:$0xf] %vm472, %v471
        %v474 = vpack.c.bf16 %v470, %v470
        %v476 = vunpack.c.l.b16 %v474
        %v477 = vpack.c.b16 %v476, %v476
        %478 = vrot.lane.b32.xlu0 %v477, 96
        %v479 = vpop.permute.xlu0 %478
        %481 = vst.msk [vmem:[%s279] sm:$0xf] %vm472, %v479
        %v482 = vpack.c.bf16 %v420, %v420
        %v484 = vunpack.c.l.b16 %v482
        %v485 = vpack.c.b16 %v484, %v484
        %486 = vrot.lane.b32.xlu0 %v485, 64
        %v487 = vpop.permute.xlu0 %486
        %489 = vst.msk [vmem:[%s286] sm:$0xf] %vm472, %v487
        %v491 = vunpack.c.l.b16 %v471
        %v492 = vpack.c.b16 %v491, %v491
        %493 = vrot.lane.b32.xlu0 %v492, 112
        %v494 = vpop.permute.xlu0 %493
        %s496 = scalar_lea.vmem %s272, 4 [#allocation2]
        %497 = vst.msk [vmem:[%s496] sm:$0xf] %vm472, %v494
        %498 = vrot.lane.b32.xlu0 %v477, 80
        %v499 = vpop.permute.xlu0 %498
        %s501 = scalar_lea.vmem %s279, 4 [#allocation4]
        %502 = vst.msk [vmem:[%s501] sm:$0xf] %vm472, %v499
        %503 = vrot.lane.b32.xlu0 %v485, 48
        %v504 = vpop.permute.xlu0 %503
        %s506 = scalar_lea.vmem %s286, 4 [#allocation6]
        %507 = vst.msk [vmem:[%s506] sm:$0xf] %vm472, %v504
        %s508 = sand.u32 %s137, 1
        %s509 = scalar_lea.sflag [#allocation3], %s508
        %s510 = sand.u32 %s137, 1
        %s511 = smul.addr %s510, 8
        %s512 = scalar_lea.vmem [#allocation2], %s511
        %s513 = sand.u32 %s24, 1
        %s514 = scalar_lea.sflag [#allocation5], %s513
        %s515 = sand.u32 %s165, 1
        %s516 = smul.addr %s515, 8
        %s517 = scalar_lea.vmem [#allocation4], %s516
        %s518 = sand.u32 %s24, 1
        %s519 = scalar_lea.sflag [#allocation5], %s518
        %s520 = sand.u32 %s193, 1
        %s521 = smul.addr %s520, 8
        %s522 = scalar_lea.vmem [#allocation6], %s521
        // Predicated region
        $region37: #{tpu_custom_call.1} parent=35 // pred_check
          %p523 = pneg %p147
        $region38: #{tpu_custom_call.1} parent=35 // pred_check_branch
          %525 = sbr.rel (%p523) target = $region40
        $region39: #{tpu_custom_call.1} parent=35 // pred_region
          %s527 = ssub.s32 128, 128
          %528 = vsyncadd %s509, %s527
          %s529 = smul.addr %s28, 2
          %s530 = sadd.s32 %s29, %s529
          %s531 = smul.addr %s530, 64
          %s532 = scalar_lea.hbm %s4, %s531
          %s533 = sshll.u32 %s512, 4
          %s534 = int_to_ptr.vmem [resolvable:$true] %s533
          %539 = dma.vmem_to_hbm [thread:$0]  %s534, 128, %s532, %s509, 64, 64, 4
        $region40: #{tpu_custom_call.1} parent=35 // pred_fallthru
          _
        // Predicated region
        $region41: #{tpu_custom_call.1} parent=35 // pred_check
          %p540 = pneg %p175
        $region42: #{tpu_custom_call.1} parent=35 // pred_check_branch
          %542 = sbr.rel (%p540) target = $region44
        $region43: #{tpu_custom_call.1} parent=35 // pred_region
          %s544 = ssub.s32 128, 128
          %545 = vsyncadd %s514, %s544
          %s546 = smul.addr %s28, 2
          %s547 = sadd.s32 %s29, %s546
          %s548 = smul.addr %s547, 64
          %s549 = scalar_lea.hbm %s5, %s548
          %s550 = sshll.u32 %s517, 4
          %s551 = int_to_ptr.vmem [resolvable:$true] %s550
          %556 = dma.vmem_to_hbm [thread:$0]  %s551, 128, %s549, %s514, 64, 64, 4
        $region44: #{tpu_custom_call.1} parent=35 // pred_fallthru
          _
        // Predicated region
        $region45: #{tpu_custom_call.1} parent=35 // pred_check
          %p557 = pneg %p203
        $region46: #{tpu_custom_call.1} parent=35 // pred_check_branch
          %559 = sbr.rel (%p557) target = $region48
        $region47: #{tpu_custom_call.1} parent=35 // pred_region
          %s561 = ssub.s32 128, 128
          %562 = vsyncadd %s519, %s561
          %s563 = smul.addr %s28, 2
          %s564 = sadd.s32 %s29, %s563
          %s565 = smul.addr %s564, 64
          %s566 = scalar_lea.hbm %s6, %s565
          %s567 = sshll.u32 %s522, 4
          %s568 = int_to_ptr.vmem [resolvable:$true] %s567
          %573 = dma.vmem_to_hbm [thread:$0]  %s568, 128, %s566, %s519, 64, 64, 4
        $region48: #{tpu_custom_call.1} parent=35 // pred_fallthru
          _
      $region36: #{tpu_custom_call.1} parent=5 // pred_fallthru
        _
      %p574 = scmp.le.s32.totalorder 2, %s19
      // Predicated region
      $region49: #{tpu_custom_call.1} parent=5 // pred_check
        %p575 = pneg %p574
      $region50: #{tpu_custom_call.1} parent=5 // pred_check_branch
        %577 = sbr.rel (%p575) target = $region52
      $region51: #{tpu_custom_call.1} parent=5 // pred_region
        %s578 = ssub.s32 %s19, 2
        // Predicated region
        $region53: #{tpu_custom_call.1} parent=51 // pred_check
          %p579 = pneg %p153
        $region54: #{tpu_custom_call.1} parent=51 // pred_check_branch
          %581 = sbr.rel (%p579) target = $region56
        $region55: #{tpu_custom_call.1} parent=51 // pred_region
          %s582 = sand.u32 %s138, 1
          %s583 = scalar_lea.sflag [#allocation3], %s582
          %s584 = sand.u32 %s138, 1
          %s585 = smul.addr %s584, 8
          %s586 = scalar_lea.vmem [#allocation2], %s585
          %587 = dma.done %s583, 128
        $region56: #{tpu_custom_call.1} parent=51 // pred_fallthru
          _
        // Predicated region
        $region57: #{tpu_custom_call.1} parent=51 // pred_check
          %p588 = pneg %p181
        $region58: #{tpu_custom_call.1} parent=51 // pred_check_branch
          %590 = sbr.rel (%p588) target = $region60
        $region59: #{tpu_custom_call.1} parent=51 // pred_region
          %s591 = sand.u32 %s25, 1
          %s592 = scalar_lea.sflag [#allocation5], %s591
          %s593 = sand.u32 %s166, 1
          %s594 = smul.addr %s593, 8
          %s595 = scalar_lea.vmem [#allocation4], %s594
          %596 = dma.done %s592, 128
        $region60: #{tpu_custom_call.1} parent=51 // pred_fallthru
          _
        // Predicated region
        $region61: #{tpu_custom_call.1} parent=51 // pred_check
          %p597 = pneg %p209
        $region62: #{tpu_custom_call.1} parent=51 // pred_check_branch
          %599 = sbr.rel (%p597) target = $region64
        $region63: #{tpu_custom_call.1} parent=51 // pred_region
          %s600 = sand.u32 %s25, 1
          %s601 = scalar_lea.sflag [#allocation5], %s600
          %s602 = sand.u32 %s194, 1
          %s603 = smul.addr %s602, 8
          %s604 = scalar_lea.vmem [#allocation6], %s603
          %605 = dma.done %s601, 128
        $region64: #{tpu_custom_call.1} parent=51 // pred_fallthru
          _
      $region52: #{tpu_custom_call.1} parent=5 // pred_fallthru
        _
    $region6: #{tpu_custom_call.1} parent=1 // loop_footer
      %s23 = sadd.s32 1, %s19
    $region7: #{tpu_custom_call.1} parent=1 // loop_footer_branch
      %18 = sbr.rel target = $region3
    $region8: #{tpu_custom_call.1} parent=1 // loop_exit
      _
    %606 = vsyncpa [#allocation3], 1
    %s607 = scalar_lea.sflag [#allocation3], 1
    %608 = vsyncpa %s607, 1
    %609 = vsyncpa [#allocation5], 1
    %s610 = scalar_lea.sflag [#allocation5], 1
    %611 = vsyncpa %s610, 1

</llo_original>
